<compile_context>
chip_gen: v6e
topology: v6e:2x2x1
jax: 0.10.0
libtpu: 0.0.40
codegen_flags: <defaults>
</compile_context>

<pallas_src>
import math
from functools import partial

import jax
import jax.numpy as jnp
from jax.experimental import pallas as pl
from jax.experimental.pallas import tpu as pltpu

_HALF_LOG_2PI = 0.5 * math.log(2.0 * math.pi)


def _actor_kernel(obs_ref, w1_ref, b1_ref, w2_ref, b2_ref, wh_ref, bh_ref,
                  eps_ref, out_ref, *, action_dim):
    x = obs_ref[...]                                       # (TB, obs_dim) bf16

    # --- two-layer MLP trunk: Linear -> ReLU -> Linear -> ReLU ---
    h1 = jnp.dot(x, w1_ref[...], preferred_element_type=jnp.float32) + b1_ref[...]
    h1 = jnp.maximum(h1, 0.0).astype(w2_ref.dtype)
    h2 = jnp.dot(h1, w2_ref[...], preferred_element_type=jnp.float32) + b2_ref[...]
    h2 = jnp.maximum(h2, 0.0).astype(wh_ref.dtype)

    # --- fused heads: single (H, 2*A) matmul, then static split ---
    heads = jnp.dot(h2, wh_ref[...], preferred_element_type=jnp.float32) + bh_ref[...]
    mean = heads[:, :action_dim]
    log_std = heads[:, action_dim:]

    # --- Normal(mean, std): sample (reparameterized), log_prob, entropy ---
    std = jnp.exp(log_std)
    eps = eps_ref[...]
    action = mean + std * eps

    # (action - mean) == std * eps  =>  quadratic term collapses to eps^2 / 2.
    log_prob = -0.5 * (eps * eps) - log_std - _HALF_LOG_2PI
    entropy = 0.5 + _HALF_LOG_2PI + log_std

    # Single packed store: [action | log_prob | entropy] along the lane axis.
    out_ref[...] = jnp.concatenate([action, log_prob, entropy], axis=-1)


def ppo_continuous_actor(obs, params, eps, *, block_b=512):
    """PPOContinuousActor forward (action=None path).

    Args:
      obs:    (B, obs_dim) float array.
      params: dict with w1/b1, w2/b2, wm/bm, ws/bs (weights bf16, biases f32,
              weights stored as (in_features, out_features), biases as (1, out)).
      eps:    (B, action_dim) standard-normal noise (sample = mean + std*eps).

    Returns:
      (action, log_prob, entropy), each (B, action_dim) float32.
    """
    B, obs_dim = obs.shape
    A = eps.shape[1]
    H = params["w1"].shape[1]
    wdt = params["w1"].dtype
    w_itemsize = jnp.dtype(wdt).itemsize

    # Fuse the two head projections into one matmul.
    wh = jnp.concatenate([params["wm"], params["ws"]], axis=1)    # (H, 2A)
    bh = jnp.concatenate([params["bm"], params["bs"]], axis=1)    # (1, 2A)

    # Batch tiling (tile = full batch when small; 512-row tiles otherwise).
    tb = B if B <= block_b else block_b
    n_blocks = pl.cdiv(B, tb)
    b_pad = n_blocks * tb

    obs_p = obs.astype(wdt)
    eps_p = eps.astype(jnp.float32)
    if b_pad != B:
        obs_p = jnp.pad(obs_p, ((0, b_pad - B), (0, 0)))
        eps_p = jnp.pad(eps_p, ((0, b_pad - B), (0, 0)))

    def row_spec(d):
        return pl.BlockSpec((tb, d), lambda i: (i, 0))

    def const_spec(shape):
        return pl.BlockSpec(shape, lambda i: (0, 0))

    # VMEM budget: double-buffered batch tiles + resident weights + headroom.
    tile_bytes = tb * (obs_dim * w_itemsize + A * 4 + 3 * A * 4)
    weight_bytes = (obs_dim * H + H * H + H * 2 * A) * w_itemsize + (2 * H + 2 * A) * 4
    vmem_bytes = int(min(max(2 * tile_bytes + 2 * weight_bytes + (4 << 20), 16 << 20),
                         48 << 20))

    matmul_flops = 2 * b_pad * (obs_dim * H + H * H + H * 2 * A)
    cost = pl.CostEstimate(
        flops=matmul_flops + 10 * b_pad * A,
        transcendentals=b_pad * A,
        bytes_accessed=(obs_p.size * w_itemsize + eps_p.size * 4
                        + weight_bytes + b_pad * 3 * A * 4),
    )

    packed = pl.pallas_call(
        partial(_actor_kernel, action_dim=A),
        out_shape=jax.ShapeDtypeStruct((b_pad, 3 * A), jnp.float32),
        grid=(n_blocks,),
        in_specs=[
            row_spec(obs_dim),          # obs
            const_spec((obs_dim, H)),   # w1
            const_spec((1, H)),         # b1
            const_spec((H, H)),         # w2
            const_spec((1, H)),         # b2
            const_spec((H, 2 * A)),     # fused head weight
            const_spec((1, 2 * A)),     # fused head bias
            row_spec(A),                # eps
        ],
        out_specs=pl.BlockSpec((tb, 3 * A), lambda i: (i, 0)),
        compiler_params=pltpu.CompilerParams(
            dimension_semantics=("parallel",),
            vmem_limit_bytes=vmem_bytes,
        ),
        cost_estimate=cost,
    )(obs_p, params["w1"], params["b1"], params["w2"], params["b2"], wh, bh, eps_p)

    packed = packed[:B]
    return packed[:, :A], packed[:, A:2 * A], packed[:, 2 * A:]


def init_params(key, obs_dim, action_dim, hidden_size):
    """PyTorch-style Linear init U(-1/sqrt(fan_in), 1/sqrt(fan_in)).

    Weights stored bf16 (bandwidth), biases f32.
    """
    def linear(k, fan_in, fan_out):
        kw, kb = jax.random.split(k)
        bound = 1.0 / math.sqrt(fan_in)
        w = jax.random.uniform(kw, (fan_in, fan_out), jnp.float32, -bound, bound)
        b = jax.random.uniform(kb, (1, fan_out), jnp.float32, -bound, bound)
        return w.astype(jnp.bfloat16), b

    k1, k2, k3, k4 = jax.random.split(key, 4)
    w1, b1 = linear(k1, obs_dim, hidden_size)
    w2, b2 = linear(k2, hidden_size, hidden_size)
    wm, bm = linear(k3, hidden_size, action_dim)
    ws, bs = linear(k4, hidden_size, action_dim)
    return {"w1": w1, "b1": b1, "w2": w2, "b2": b2,
            "wm": wm, "bm": bm, "ws": ws, "bs": bs}


def _reference(obs, params, eps):
    """Pure-JAX reference with the same bf16 weights / f32 accumulation."""
    wdt = params["w1"].dtype
    x = obs.astype(wdt)
    h1 = jnp.maximum(jnp.dot(x, params["w1"], preferred_element_type=jnp.float32)
                     + params["b1"], 0.0).astype(wdt)
    h2 = jnp.maximum(jnp.dot(h1, params["w2"], preferred_element_type=jnp.float32)
                     + params["b2"], 0.0).astype(wdt)
    mean = jnp.dot(h2, params["wm"], preferred_element_type=jnp.float32) + params["bm"]
    log_std = jnp.dot(h2, params["ws"], preferred_element_type=jnp.float32) + params["bs"]
    std = jnp.exp(log_std)
    action = mean + std * eps
    log_prob = -((action - mean) ** 2) / (2.0 * std * std) - log_std - _HALF_LOG_2PI
    entropy = 0.5 + _HALF_LOG_2PI + log_std
    return action, log_prob, entropy


if __name__ == "__main__":
    B, OBS_DIM, ACT_DIM, HIDDEN = 8, 16, 8, 32

    key = jax.random.PRNGKey(0)
    k_params, k_obs, k_eps = jax.random.split(key, 3)

    params = init_params(k_params, OBS_DIM, ACT_DIM, HIDDEN)
    obs = jax.random.normal(k_obs, (B, OBS_DIM), jnp.float32)
    eps = jax.random.normal(k_eps, (B, ACT_DIM), jnp.float32)

    action, log_prob, entropy = jax.jit(ppo_continuous_actor)(obs, params, eps)
    jax.block_until_ready((action, log_prob, entropy))

    ref_action, ref_logp, ref_ent = _reference(obs, params, eps)
    assert jnp.allclose(action, ref_action, atol=1e-3, rtol=1e-3)
    assert jnp.allclose(log_prob, ref_logp, atol=1e-3, rtol=1e-3)
    assert jnp.allclose(entropy, ref_ent, atol=1e-3, rtol=1e-3)

    print("KERNEL_OK")
</pallas_src>

<mosaic_0001>
module attributes {stable_mosaic.version = 11 : i64} {
  func.func @_actor_kernel(%arg0: i32, %arg1: memref<8x16xbf16, #tpu.memory_space<vmem>>, %arg2: memref<16x32xbf16, #tpu.memory_space<vmem>>, %arg3: memref<1x32xf32, #tpu.memory_space<vmem>>, %arg4: memref<32x32xbf16, #tpu.memory_space<vmem>>, %arg5: memref<1x32xf32, #tpu.memory_space<vmem>>, %arg6: memref<32x16xbf16, #tpu.memory_space<vmem>>, %arg7: memref<1x16xf32, #tpu.memory_space<vmem>>, %arg8: memref<8x8xf32, #tpu.memory_space<vmem>>, %arg9: memref<8x24xf32, #tpu.memory_space<vmem>>) attributes {dimension_semantics = [#tpu.dimension_semantics<parallel>], iteration_bounds = array<i64: 1>, scalar_prefetch = 0 : i64, scratch_operands = 0 : i64, tpu.core_type = #tpu.core_type<tc>, window_params = [{transform_indices = @transform_0, window_bounds = array<i64: 8, 16>}, {pipeline_mode = #tpu.pipeline_mode<synchronous>, transform_indices = @transform_1, window_bounds = array<i64: 16, 32>}, {pipeline_mode = #tpu.pipeline_mode<synchronous>, transform_indices = @transform_2, window_bounds = array<i64: 1, 32>}, {pipeline_mode = #tpu.pipeline_mode<synchronous>, transform_indices = @transform_3, window_bounds = array<i64: 32, 32>}, {pipeline_mode = #tpu.pipeline_mode<synchronous>, transform_indices = @transform_4, window_bounds = array<i64: 1, 32>}, {pipeline_mode = #tpu.pipeline_mode<synchronous>, transform_indices = @transform_5, window_bounds = array<i64: 32, 16>}, {pipeline_mode = #tpu.pipeline_mode<synchronous>, transform_indices = @transform_6, window_bounds = array<i64: 1, 16>}, {transform_indices = @transform_7, window_bounds = array<i64: 8, 8>}, {transform_indices = @transform_8, window_bounds = array<i64: 8, 24>}]} {
    %c0 = arith.constant 0 : index
    %c0_0 = arith.constant 0 : index
    %0 = vector.load %arg1[%c0, %c0_0] : memref<8x16xbf16, #tpu.memory_space<vmem>>, vector<8x16xbf16>
    %c0_1 = arith.constant 0 : index
    %c0_2 = arith.constant 0 : index
    %1 = vector.load %arg2[%c0_1, %c0_2] : memref<16x32xbf16, #tpu.memory_space<vmem>>, vector<16x32xbf16>
    %cst = arith.constant dense<0.000000e+00> : vector<8x32xf32>
    %2 = tpu.matmul %0, %1, %cst {dimension_numbers = #tpu.dot_dimension_numbers<[1], [0], [0], [1], [0, 0, 1, 1], [], []>} : vector<8x16xbf16>, vector<16x32xbf16>, vector<8x32xf32> -> vector<8x32xf32>
    %c0_3 = arith.constant 0 : index
    %c0_4 = arith.constant 0 : index
    %3 = vector.load %arg3[%c0_3, %c0_4] : memref<1x32xf32, #tpu.memory_space<vmem>>, vector<1x32xf32>
    %4 = vector.broadcast %3 : vector<1x32xf32> to vector<8x32xf32>
    %5 = arith.addf %2, %4 : vector<8x32xf32>
    %cst_5 = arith.constant 0.000000e+00 : f32
    %6 = vector.broadcast %cst_5 : f32 to vector<8x32xf32>
    %7 = arith.maximumf %5, %6 : vector<8x32xf32>
    %8 = arith.truncf %7 : vector<8x32xf32> to vector<8x32xbf16>
    %c0_6 = arith.constant 0 : index
    %c0_7 = arith.constant 0 : index
    %9 = vector.load %arg4[%c0_6, %c0_7] : memref<32x32xbf16, #tpu.memory_space<vmem>>, vector<32x32xbf16>
    %cst_8 = arith.constant dense<0.000000e+00> : vector<8x32xf32>
    %10 = tpu.matmul %8, %9, %cst_8 {dimension_numbers = #tpu.dot_dimension_numbers<[1], [0], [0], [1], [0, 0, 1, 1], [], []>} : vector<8x32xbf16>, vector<32x32xbf16>, vector<8x32xf32> -> vector<8x32xf32>
    %c0_9 = arith.constant 0 : index
    %c0_10 = arith.constant 0 : index
    %11 = vector.load %arg5[%c0_9, %c0_10] : memref<1x32xf32, #tpu.memory_space<vmem>>, vector<1x32xf32>
    %12 = vector.broadcast %11 : vector<1x32xf32> to vector<8x32xf32>
    %13 = arith.addf %10, %12 : vector<8x32xf32>
    %cst_11 = arith.constant 0.000000e+00 : f32
    %14 = vector.broadcast %cst_11 : f32 to vector<8x32xf32>
    %15 = arith.maximumf %13, %14 : vector<8x32xf32>
    %16 = arith.truncf %15 : vector<8x32xf32> to vector<8x32xbf16>
    %c0_12 = arith.constant 0 : index
    %c0_13 = arith.constant 0 : index
    %17 = vector.load %arg6[%c0_12, %c0_13] : memref<32x16xbf16, #tpu.memory_space<vmem>>, vector<32x16xbf16>
    %cst_14 = arith.constant dense<0.000000e+00> : vector<8x16xf32>
    %18 = tpu.matmul %16, %17, %cst_14 {dimension_numbers = #tpu.dot_dimension_numbers<[1], [0], [0], [1], [0, 0, 1, 1], [], []>} : vector<8x32xbf16>, vector<32x16xbf16>, vector<8x16xf32> -> vector<8x16xf32>
    %c0_15 = arith.constant 0 : index
    %c0_16 = arith.constant 0 : index
    %19 = vector.load %arg7[%c0_15, %c0_16] : memref<1x16xf32, #tpu.memory_space<vmem>>, vector<1x16xf32>
    %20 = vector.broadcast %19 : vector<1x16xf32> to vector<8x16xf32>
    %21 = arith.addf %18, %20 : vector<8x16xf32>
    %22 = vector.extract_strided_slice %21 {offsets = [0, 0], sizes = [8, 8], strides = [1, 1]} : vector<8x16xf32> to vector<8x8xf32>
    %23 = vector.extract_strided_slice %21 {offsets = [0, 8], sizes = [8, 8], strides = [1, 1]} : vector<8x16xf32> to vector<8x8xf32>
    %24 = math.exp %23 : vector<8x8xf32>
    %c0_17 = arith.constant 0 : index
    %c0_18 = arith.constant 0 : index
    %25 = vector.load %arg8[%c0_17, %c0_18] : memref<8x8xf32, #tpu.memory_space<vmem>>, vector<8x8xf32>
    %26 = arith.mulf %24, %25 : vector<8x8xf32>
    %27 = arith.addf %22, %26 : vector<8x8xf32>
    %28 = arith.mulf %25, %25 : vector<8x8xf32>
    %cst_19 = arith.constant -5.000000e-01 : f32
    %29 = vector.broadcast %cst_19 : f32 to vector<8x8xf32>
    %30 = arith.mulf %29, %28 : vector<8x8xf32>
    %31 = arith.subf %30, %23 : vector<8x8xf32>
    %cst_20 = arith.constant 0.918938517 : f32
    %32 = vector.broadcast %cst_20 : f32 to vector<8x8xf32>
    %33 = arith.subf %31, %32 : vector<8x8xf32>
    %cst_21 = arith.constant 1.41893852 : f32
    %34 = vector.broadcast %cst_21 : f32 to vector<8x8xf32>
    %35 = arith.addf %34, %23 : vector<8x8xf32>
    %36 = tpu.concatenate %27, %33, %35 in 1 : vector<8x8xf32>, vector<8x8xf32>, vector<8x8xf32> -> vector<8x24xf32>
    %c0_22 = arith.constant 0 : index
    %c0_23 = arith.constant 0 : index
    %37 = vector.load %arg9[%c0_22, %c0_23] : memref<8x24xf32, #tpu.memory_space<vmem>>, vector<8x24xf32>
    tpu.vector_store %arg9[%c0_22, %c0_23], %36 {strides = array<i32>} : memref<8x24xf32, #tpu.memory_space<vmem>>, vector<8x24xf32>,
    return
  }
  func.func @transform_0(%arg0: i32) -> (i32, i32) {
    %c0_i32 = arith.constant 0 : i32
    %c0_i32_0 = arith.constant 0 : i32
    return %arg0, %c0_i32 : i32, i32
  }
  func.func @transform_1(%arg0: i32) -> (i32, i32) {
    %c0_i32 = arith.constant 0 : i32
    %c0_i32_0 = arith.constant 0 : i32
    %c0_i32_1 = arith.constant 0 : i32
    return %c0_i32, %c0_i32_0 : i32, i32
  }
  func.func @transform_2(%arg0: i32) -> (i32, i32) {
    %c0_i32 = arith.constant 0 : i32
    %c0_i32_0 = arith.constant 0 : i32
    %c0_i32_1 = arith.constant 0 : i32
    return %c0_i32, %c0_i32_0 : i32, i32
  }
  func.func @transform_3(%arg0: i32) -> (i32, i32) {
    %c0_i32 = arith.constant 0 : i32
    %c0_i32_0 = arith.constant 0 : i32
    %c0_i32_1 = arith.constant 0 : i32
    return %c0_i32, %c0_i32_0 : i32, i32
  }
  func.func @transform_4(%arg0: i32) -> (i32, i32) {
    %c0_i32 = arith.constant 0 : i32
    %c0_i32_0 = arith.constant 0 : i32
    %c0_i32_1 = arith.constant 0 : i32
    return %c0_i32, %c0_i32_0 : i32, i32
  }
  func.func @transform_5(%arg0: i32) -> (i32, i32) {
    %c0_i32 = arith.constant 0 : i32
    %c0_i32_0 = arith.constant 0 : i32
    %c0_i32_1 = arith.constant 0 : i32
    return %c0_i32, %c0_i32_0 : i32, i32
  }
  func.func @transform_6(%arg0: i32) -> (i32, i32) {
    %c0_i32 = arith.constant 0 : i32
    %c0_i32_0 = arith.constant 0 : i32
    %c0_i32_1 = arith.constant 0 : i32
    return %c0_i32, %c0_i32_0 : i32, i32
  }
  func.func @transform_7(%arg0: i32) -> (i32, i32) {
    %c0_i32 = arith.constant 0 : i32
    %c0_i32_0 = arith.constant 0 : i32
    return %arg0, %c0_i32 : i32, i32
  }
  func.func @transform_8(%arg0: i32) -> (i32, i32) {
    %c0_i32 = arith.constant 0 : i32
    %c0_i32_0 = arith.constant 0 : i32
    return %arg0, %c0_i32 : i32, i32
  }
}

</mosaic_0001>

<llo_original>
// kernel: ppo_continuous_actor.1
$region0: #{ppo_continuous_actor.1}
  #allocation0 [shape = 'u32[]', space=smem, size = 0x4, offset = 0x4, fixed_abs, tag = 'smem constant byte address 0x4 - core index']
  #allocation1 [shape = 'u32[144,128]{1,0:T(1,128)}', space=vmem, size = 0x12000, scoped, tag = 'internal scratch']
  %s0 = inlined_call_operand.vmem [shape: bf16[8,16], index: 0, kind: input, shape index: {}]
  %s1 = inlined_call_operand.vmem [shape: bf16[16,32], index: 1, kind: input, shape index: {}]
  %s2 = inlined_call_operand.vmem [shape: f32[1,32], index: 2, kind: input, shape index: {}]
  %s3 = inlined_call_operand.vmem [shape: bf16[32,32], index: 3, kind: input, shape index: {}]
  %s4 = inlined_call_operand.vmem [shape: f32[1,32], index: 4, kind: input, shape index: {}]
  %s5 = inlined_call_operand.vmem [shape: bf16[32,16], index: 5, kind: input, shape index: {}]
  %s6 = inlined_call_operand.vmem [shape: f32[1,16], index: 6, kind: input, shape index: {}]
  %s7 = inlined_call_operand.vmem [shape: f32[8,8], index: 7, kind: input, shape index: {}]
  %s8 = inlined_call_operand.vmem [shape: f32[8,24], index: 8, kind: output, shape index: {}]
  %s9 = sld [smem:[#allocation0]]
  $region42: #{ppo_continuous_actor.1} parent=0
    _
  %s11 = ssub.s32 1, %s9
  %s12 = scalar_select 0, %s11, %s9
  // Predicated region
  $region2: #{ppo_continuous_actor.1} parent=0 // pred_check
    _
  $region3: #{ppo_continuous_actor.1} parent=0 // pred_check_branch
    %14 = sbr.rel (0) target = $region5
  $region4: #{ppo_continuous_actor.1} parent=0 // pred_region
    _
  $region5: #{ppo_continuous_actor.1} parent=0 // pred_fallthru
    _
  // Predicated region
  $region6: #{ppo_continuous_actor.1} parent=0 // pred_check
    _
  $region7: #{ppo_continuous_actor.1} parent=0 // pred_check_branch
    %16 = sbr.rel (0) target = $region9
  $region8: #{ppo_continuous_actor.1} parent=0 // pred_region
    _
  $region9: #{ppo_continuous_actor.1} parent=0 // pred_fallthru
    _
  // Predicated region
  $region10: #{ppo_continuous_actor.1} parent=0 // pred_check
    _
  $region11: #{ppo_continuous_actor.1} parent=0 // pred_check_branch
    %18 = sbr.rel (0) target = $region13
  $region12: #{ppo_continuous_actor.1} parent=0 // pred_region
    _
  $region13: #{ppo_continuous_actor.1} parent=0 // pred_fallthru
    _
  // Predicated region
  $region14: #{ppo_continuous_actor.1} parent=0 // pred_check
    _
  $region15: #{ppo_continuous_actor.1} parent=0 // pred_check_branch
    %20 = sbr.rel (0) target = $region17
  $region16: #{ppo_continuous_actor.1} parent=0 // pred_region
    _
  $region17: #{ppo_continuous_actor.1} parent=0 // pred_fallthru
    _
  // Predicated region
  $region18: #{ppo_continuous_actor.1} parent=0 // pred_check
    _
  $region19: #{ppo_continuous_actor.1} parent=0 // pred_check_branch
    %22 = sbr.rel (0) target = $region21
  $region20: #{ppo_continuous_actor.1} parent=0 // pred_region
    _
  $region21: #{ppo_continuous_actor.1} parent=0 // pred_fallthru
    _
  // Predicated region
  $region22: #{ppo_continuous_actor.1} parent=0 // pred_check
    _
  $region23: #{ppo_continuous_actor.1} parent=0 // pred_check_branch
    %24 = sbr.rel (0) target = $region25
  $region24: #{ppo_continuous_actor.1} parent=0 // pred_region
    _
  $region25: #{ppo_continuous_actor.1} parent=0 // pred_fallthru
    _
  // Predicated region
  $region26: #{ppo_continuous_actor.1} parent=0 // pred_check
    _
  $region27: #{ppo_continuous_actor.1} parent=0 // pred_check_branch
    %26 = sbr.rel (0) target = $region29
  $region28: #{ppo_continuous_actor.1} parent=0 // pred_region
    _
  $region29: #{ppo_continuous_actor.1} parent=0 // pred_fallthru
    _
  // Predicated region
  $region30: #{ppo_continuous_actor.1} parent=0 // pred_check
    _
  $region31: #{ppo_continuous_actor.1} parent=0 // pred_check_branch
    %28 = sbr.rel (0) target = $region33
  $region32: #{ppo_continuous_actor.1} parent=0 // pred_region
    _
  $region33: #{ppo_continuous_actor.1} parent=0 // pred_fallthru
    _
  %v30 = vld [vmem:[%s0] sm:$0xf]
  %v31 = vld [vmem:[%s1] sm:$0xf]
  %v32 = vld [vmem:[%s1 + $0x4] sm:$0xf]
  %v33 = vld [vmem:[%s2] sm:$0x1]
  %v35 = vlaneseq
  %v36 = vshrl.u32 %v35, 7
  %v37 = vsub.s32 0, %v36
  %v38 = vrot.slane %v33, %v37
  %v42 = vunpack.c.l.b16 %v31
  %v43 = vunpack.c.l.b16 %v32
  %v44 = vpack.c.b16 %v43, %v42
  %vm46 = vcmask 130048
  %v48 = vsel %vm46, %v30, 0
  %50 = vmatprep.subr.bf16.mxu0 0
  %51 = vmatpush1.bf16.msra.mxu0 0
  %52 = vmatprep.subr.bf16.mxu0 0
  %53 = vmatpush1.bf16.msra.mxu0 0
  %54 = vmatprep.subr.bf16.mxu0 0
  %55 = vmatpush1.bf16.msra.mxu0 0
  %56 = vmatprep.subr.bf16.mxu0 0
  %57 = vmatpush1.bf16.msra.mxu0 0
  %58 = vmatprep.subr.bf16.mxu0 0
  %59 = vmatpush1.bf16.msra.mxu0 0
  %60 = vmatprep.subr.bf16.mxu0 0
  %61 = vmatpush1.bf16.msra.mxu0 0
  %62 = vmatprep.subr.bf16.mxu0 0
  %63 = vmatpush1.bf16.msra.mxu0 0
  %64 = vmatprep.subr.bf16.mxu0 0
  %65 = vmatpush1.bf16.msra.mxu0 %v44
  %66 = vmatprep.subr.bf16.mxu0 0
  %67 = vmatpush2.bf16.msra.mxu0 0
  %68 = vmatprep.subr.bf16.mxu0 0
  %69 = vmatpush2.bf16.msra.mxu0 0
  %70 = vmatprep.subr.bf16.mxu0 0
  %71 = vmatpush2.bf16.msra.mxu0 0
  %72 = vmatprep.subr.bf16.mxu0 0
  %73 = vmatpush2.bf16.msra.mxu0 0
  %74 = vmatprep.subr.bf16.mxu0 0
  %75 = vmatpush2.bf16.msra.mxu0 0
  %76 = vmatprep.subr.bf16.mxu0 0
  %77 = vmatpush2.bf16.msra.mxu0 0
  %78 = vmatprep.subr.bf16.mxu0 0
  %79 = vmatpush2.bf16.msra.mxu0 0
  %80 = vmatprep.subr.bf16.mxu0 0
  %81 = vmatpush2.bf16.msra.mxu0 0
  %82 = vmatprep.mubr.bf16.mxu0 0
  %83 = vmatmul.mubr.bf16.gmra.mxu0 %v48
  %v84 = vpop.f32.mrf.mxu0
  %v85 = vadd.f32 %v38, %v84
  %v86 = vpop.f32.mrf.mxu0
  %v87 = vpop.f32.mrf.mxu0
  %v88 = vpop.f32.mrf.mxu0
  %89 = vdwg.mxu0
  %v90 = vmax.f32 %v85, 0.0
  %v91 = vpack.c.bf16 %v90, %v90
  %v92 = vld [vmem:[%s3] sm:$0xf]
  %v93 = vld [vmem:[%s3 + $0x4] sm:$0xf]
  %v94 = vld [vmem:[%s3 + $0x8] sm:$0xf]
  %v95 = vld [vmem:[%s3 + $0xc] sm:$0xf]
  %v96 = vld [vmem:[%s4] sm:$0x1]
  %v98 = vlaneseq
  %v99 = vshrl.u32 %v98, 7
  %v100 = vsub.s32 0, %v99
  %v101 = vrot.slane %v96, %v100
  %v107 = vunpack.c.l.b16 %v92
  %v108 = vunpack.c.l.b16 %v93
  %v109 = vunpack.c.l.b16 %v94
  %v110 = vunpack.c.l.b16 %v95
  %v111 = vpack.c.b16 %v108, %v107
  %v112 = vpack.c.b16 %v110, %v109
  %vm115 = vcmask 261120
  %v117 = vsel %vm115, %v91, 0
  %119 = vmatprep.subr.bf16.mxu0 0
  %120 = vmatpush1.bf16.msra.mxu0 0
  %121 = vmatprep.subr.bf16.mxu0 0
  %122 = vmatpush1.bf16.msra.mxu0 0
  %123 = vmatprep.subr.bf16.mxu0 0
  %124 = vmatpush1.bf16.msra.mxu0 0
  %125 = vmatprep.subr.bf16.mxu0 0
  %126 = vmatpush1.bf16.msra.mxu0 0
  %127 = vmatprep.subr.bf16.mxu0 0
  %128 = vmatpush1.bf16.msra.mxu0 0
  %129 = vmatprep.subr.bf16.mxu0 0
  %130 = vmatpush1.bf16.msra.mxu0 0
  %131 = vmatprep.subr.bf16.mxu0 0
  %132 = vmatpush1.bf16.msra.mxu0 %v112
  %133 = vmatprep.subr.bf16.mxu0 0
  %134 = vmatpush1.bf16.msra.mxu0 %v111
  %135 = vmatprep.subr.bf16.mxu0 0
  %136 = vmatpush2.bf16.msra.mxu0 0
  %137 = vmatprep.subr.bf16.mxu0 0
  %138 = vmatpush2.bf16.msra.mxu0 0
  %139 = vmatprep.subr.bf16.mxu0 0
  %140 = vmatpush2.bf16.msra.mxu0 0
  %141 = vmatprep.subr.bf16.mxu0 0
  %142 = vmatpush2.bf16.msra.mxu0 0
  %143 = vmatprep.subr.bf16.mxu0 0
  %144 = vmatpush2.bf16.msra.mxu0 0
  %145 = vmatprep.subr.bf16.mxu0 0
  %146 = vmatpush2.bf16.msra.mxu0 0
  %147 = vmatprep.subr.bf16.mxu0 0
  %148 = vmatpush2.bf16.msra.mxu0 0
  %149 = vmatprep.subr.bf16.mxu0 0
  %150 = vmatpush2.bf16.msra.mxu0 0
  %151 = vmatprep.mubr.bf16.mxu0 0
  %152 = vmatmul.mubr.bf16.gmra.mxu0 %v117
  %v153 = vpop.f32.mrf.mxu0
  %v154 = vadd.f32 %v101, %v153
  %v155 = vpop.f32.mrf.mxu0
  %v156 = vpop.f32.mrf.mxu0
  %v157 = vpop.f32.mrf.mxu0
  %158 = vdwg.mxu0
  %v159 = vmax.f32 %v154, 0.0
  %v160 = vpack.c.bf16 %v159, %v159
  %v161 = vld [vmem:[%s5] sm:$0xf]
  %v162 = vld [vmem:[%s5 + $0x4] sm:$0xf]
  %v163 = vld [vmem:[%s5 + $0x8] sm:$0xf]
  %v164 = vld [vmem:[%s5 + $0xc] sm:$0xf]
  %v165 = vld [vmem:[%s6] sm:$0x1]
  %v167 = vlaneseq
  %v168 = vshrl.u32 %v167, 7
  %v169 = vsub.s32 0, %v168
  %v170 = vrot.slane %v165, %v169
  %v176 = vunpack.c.l.b16 %v161
  %v177 = vunpack.c.l.b16 %v162
  %v178 = vunpack.c.l.b16 %v163
  %v179 = vunpack.c.l.b16 %v164
  %v180 = vpack.c.b16 %v177, %v176
  %v181 = vpack.c.b16 %v179, %v178
  %v185 = vsel %vm115, %v160, 0
  %187 = vmatprep.subr.bf16.mxu0 0
  %188 = vmatpush1.bf16.msra.mxu0 0
  %189 = vmatprep.subr.bf16.mxu0 0
  %190 = vmatpush1.bf16.msra.mxu0 0
  %191 = vmatprep.subr.bf16.mxu0 0
  %192 = vmatpush1.bf16.msra.mxu0 0
  %193 = vmatprep.subr.bf16.mxu0 0
  %194 = vmatpush1.bf16.msra.mxu0 0
  %195 = vmatprep.subr.bf16.mxu0 0
  %196 = vmatpush1.bf16.msra.mxu0 0
  %197 = vmatprep.subr.bf16.mxu0 0
  %198 = vmatpush1.bf16.msra.mxu0 0
  %199 = vmatprep.subr.bf16.mxu0 0
  %200 = vmatpush1.bf16.msra.mxu0 %v181
  %201 = vmatprep.subr.bf16.mxu0 0
  %202 = vmatpush1.bf16.msra.mxu0 %v180
  %203 = vmatprep.subr.bf16.mxu0 0
  %204 = vmatpush2.bf16.msra.mxu0 0
  %205 = vmatprep.subr.bf16.mxu0 0
  %206 = vmatpush2.bf16.msra.mxu0 0
  %207 = vmatprep.subr.bf16.mxu0 0
  %208 = vmatpush2.bf16.msra.mxu0 0
  %209 = vmatprep.subr.bf16.mxu0 0
  %210 = vmatpush2.bf16.msra.mxu0 0
  %211 = vmatprep.subr.bf16.mxu0 0
  %212 = vmatpush2.bf16.msra.mxu0 0
  %213 = vmatprep.subr.bf16.mxu0 0
  %214 = vmatpush2.bf16.msra.mxu0 0
  %215 = vmatprep.subr.bf16.mxu0 0
  %216 = vmatpush2.bf16.msra.mxu0 0
  %217 = vmatprep.subr.bf16.mxu0 0
  %218 = vmatpush2.bf16.msra.mxu0 0
  %219 = vmatprep.mubr.bf16.mxu0 0
  %220 = vmatmul.mubr.bf16.gmra.mxu0 %v185
  %v221 = vpop.f32.mrf.mxu0
  %v222 = vadd.f32 %v170, %v221
  %v223 = vpop.f32.mrf.mxu0
  %v224 = vpop.f32.mrf.mxu0
  %v225 = vpop.f32.mrf.mxu0
  %226 = vdwg.mxu0
  %v227 = vmul.f32 %v222, 1.442695
  %v228 = vpow.pop %v227
  %v229 = vld [vmem:[%s7] sm:$0xff]
  %231 = vrot.lane.b32.xlu0 %v229, 8
  %v232 = vpop.permute.xlu0 %231
  %v234 = vmul.f32 %v228, %v232
  %236 = vrot.lane.b32.xlu0 %v234, 120
  %v237 = vpop.permute.xlu0 %236
  %v239 = vadd.f32 %v222, %v237
  %v240 = vmul.f32 %v229, %v229
  %v241 = vmul.f32 %v240, -0.5
  %243 = vrot.lane.b32.xlu0 %v222, 120
  %v244 = vpop.permute.xlu0 %243
  %v246 = vsub.f32 %v241, %v244
  %v247 = vsub.f32 %v246, 0.9189385
  %v248 = vadd.f32 %v222, 1.4189385
  %250 = vrot.lane.b32.xlu0 %v247, 8
  %v251 = vpop.permute.xlu0 %250
  %254 = vrot.lane.b32.xlu0 %v248, 8
  %v255 = vpop.permute.xlu0 %254
  %vm257 = vcmask 64512
  %v258 = vsel %vm257, %v239, %v251
  %v259 = vsel %vm46, %v258, %v255
  %vm260 = vcmask 195584
  %261 = vst.msk [vmem:[%s8] sm:$0xff] %vm260, %v259
  // Predicated region
  $region34: #{ppo_continuous_actor.1} parent=0 // pred_check
    _
  $region35: #{ppo_continuous_actor.1} parent=0 // pred_check_branch
    %263 = sbr.rel (0) target = $region37
  $region36: #{ppo_continuous_actor.1} parent=0 // pred_region
    _
  $region37: #{ppo_continuous_actor.1} parent=0 // pred_fallthru
    _
  // Predicated region
  $region38: #{ppo_continuous_actor.1} parent=0 // pred_check
    _
  $region39: #{ppo_continuous_actor.1} parent=0 // pred_check_branch
    %265 = sbr.rel (0) target = $region41
  $region40: #{ppo_continuous_actor.1} parent=0 // pred_region
    _
  $region41: #{ppo_continuous_actor.1} parent=0 // pred_fallthru
    _

</llo_original>
